<compile_context>
chip_gen: v5e
topology: v5e:2x2
jax: 0.10.0
libtpu: 0.0.40
codegen_flags: <defaults>
</compile_context>

<pallas_src>
import functools
import math

import jax
import jax.numpy as jnp
from jax.experimental import pallas as pl
from jax.experimental.pallas import tpu as pltpu


def _round_up(n: int, m: int) -> int:
    return ((n + m - 1) // m) * m


def _make_dqn_kernel(num_layers: int, state_dim: int, width: int):
    """Fused MLP kernel over packed param slabs.

    Refs: x (tile_m, state_dim), w_slab (L, Kr, W), b_slab (L, 1, W),
          out (tile_m, W)  with W = padded lane width (multiple of 128).
    """

    def kernel(x_ref, w_ref, b_ref, out_ref):
        h = x_ref[...]  # (tile_m, state_dim)
        for i in range(num_layers):
            w = w_ref[i]  # (Kr, W), zero-padded
            # Contracting dim: state_dim for the first layer (x is unpadded),
            # `width` afterwards (activations live in the padded W lanes).
            k = state_dim if i == 0 else width
            if k != w.shape[0]:
                w = w[:k, :]
            h = jnp.dot(h, w, preferred_element_type=jnp.float32) + b_ref[i]
            if i < num_layers - 1:
                h = jnp.maximum(h, 0.0)  # ReLU on hidden layers only
        out_ref[...] = h

    return kernel


def prepare_dqn_params(weights, biases, param_dtype=jnp.float32):
    """Pack PyTorch-layout params into two lane-dense slabs (call ONCE).

    weights: list of (out_i, in_i) arrays; biases: list of (out_i,) arrays.
    Returns (w_slab, b_slab, meta):
      w_slab: (L, Kr, W) with layer i's W^T in the top-left (in_i, out_i) corner
      b_slab: (L, 1, W)  with layer i's bias in the first out_i lanes
      meta:   static shape info used by the wrapper / kernel.
    """
    num_layers = len(weights)
    state_dim = weights[0].shape[1]
    action_dim = weights[-1].shape[0]
    out_dims = [w.shape[0] for w in weights]
    width = _round_up(max(out_dims), 128)            # lane-dense activation width
    k_rows = max(width, _round_up(state_dim, 8))     # row extent of weight blocks

    w_slab = jnp.zeros((num_layers, k_rows, width), param_dtype)
    b_slab = jnp.zeros((num_layers, 1, width), param_dtype)
    layer_dims = []
    for i, (w, b) in enumerate(zip(weights, biases)):
        d_out, d_in = w.shape
        w_slab = w_slab.at[i, :d_in, :d_out].set(jnp.transpose(w).astype(param_dtype))
        b_slab = b_slab.at[i, 0, :d_out].set(b.astype(param_dtype))
        layer_dims.append((d_in, d_out))

    meta = dict(num_layers=num_layers, state_dim=state_dim,
                action_dim=action_dim, width=width, k_rows=k_rows,
                layer_dims=tuple(layer_dims))
    return w_slab, b_slab, meta


def dqn_forward_pallas(x, w_slab, b_slab, meta, *, max_tile_m=512):
    """Fused DQN forward: x (batch, state_dim) -> Q-values (batch, action_dim)."""
    num_layers = meta["num_layers"]
    state_dim = meta["state_dim"]
    action_dim = meta["action_dim"]
    width = meta["width"]
    k_rows = meta["k_rows"]
    batch = x.shape[0]

    # Batch tiling: one block at small batch; multiple-of-8 row tiles, parallel
    # grid axis (megacore on v7x, pipelined x/out DMAs) at large batch.
    tile_m = min(_round_up(batch, 8), max_tile_m)
    grid = (pl.cdiv(batch, tile_m),)

    itemsize = jnp.dtype(w_slab.dtype).itemsize
    bytes_w = w_slab.size * itemsize
    bytes_b = b_slab.size * itemsize
    bytes_x_blk = tile_m * _round_up(state_dim, 128) * 4   # VMEM lane padding
    bytes_o_blk = tile_m * width * 4
    vmem_needed = 2 * (bytes_x_blk + bytes_o_blk) + 2 * (bytes_w + bytes_b)
    vmem_limit = int(min(max(2 * vmem_needed, 4 << 20), 32 << 20))  # v7x-safe cap

    flops = 2 * batch * sum(d_in * d_out for d_in, d_out in meta["layer_dims"])
    bytes_accessed = (x.size * 4 + bytes_w + bytes_b + batch * width * 4)
    cost = pl.CostEstimate(flops=flops, transcendentals=0,
                           bytes_accessed=bytes_accessed)

    out_padded = pl.pallas_call(
        _make_dqn_kernel(num_layers, state_dim, width),
        out_shape=jax.ShapeDtypeStruct((batch, width), jnp.float32),
        grid_spec=pltpu.PrefetchScalarGridSpec(
            num_scalar_prefetch=0,
            grid=grid,
            in_specs=[
                pl.BlockSpec((tile_m, state_dim), lambda i: (i, 0)),
                # Constant block index -> params DMA'd once, VMEM-resident.
                pl.BlockSpec((num_layers, k_rows, width), lambda i: (0, 0, 0)),
                pl.BlockSpec((num_layers, 1, width), lambda i: (0, 0, 0)),
            ],
            out_specs=pl.BlockSpec((tile_m, width), lambda i: (i, 0)),
        ),
        compiler_params=pltpu.CompilerParams(
            dimension_semantics=("parallel",),
            vmem_limit_bytes=vmem_limit,
        ),
        cost_estimate=cost,
    )(x, w_slab, b_slab)

    # Padded lanes beyond action_dim are exact zeros; drop them.
    return out_padded[:, :action_dim]


def dqn_forward_ref(x, weights, biases):
    """Pure-JAX reference matching the PyTorch module exactly."""
    h = x
    for w, b in zip(weights[:-1], biases[:-1]):
        h = jnp.maximum(h @ w.T + b, 0.0)
    return h @ weights[-1].T + biases[-1]


def init_dqn_params(key, state_dim, action_dim, hidden_layer):
    """Deterministic PyTorch-style (Kaiming-uniform-ish) Linear init."""
    dims_in = [state_dim] + list(hidden_layer)
    dims_out = list(hidden_layer) + [action_dim]
    weights, biases = [], []
    for d_in, d_out in zip(dims_in, dims_out):
        key, kw, kb = jax.random.split(key, 3)
        bound = 1.0 / math.sqrt(d_in)
        w = jax.random.uniform(kw, (d_out, d_in), jnp.float32, -bound, bound)
        b = jax.random.uniform(kb, (d_out,), jnp.float32, -bound, bound)
        weights.append(w)
        biases.append(b)
    return weights, biases


if __name__ == "__main__":
    # Acrobot-like config: state_dim=6, action_dim=3, two hidden layers of 32.
    state_dim, action_dim = 6, 3
    hidden_layer = [32, 32]
    batch = 8

    key = jax.random.PRNGKey(0)
    key, kx = jax.random.split(key)
    x = jax.random.normal(kx, (batch, state_dim), jnp.float32)

    weights, biases = init_dqn_params(key, state_dim, action_dim, hidden_layer)

    # Pack params ONCE (the expensive transposes/padding happen here, not per
    # inference step). Params stay packed until the next target-network update.
    w_slab, b_slab, meta = prepare_dqn_params(weights, biases)

    fwd = jax.jit(lambda xs, ws, bs: dqn_forward_pallas(xs, ws, bs, meta))
    out = jax.block_until_ready(fwd(x, w_slab, b_slab))

    ref = dqn_forward_ref(x, weights, biases)
    assert out.shape == (batch, action_dim)
    assert jnp.allclose(out, ref, atol=1e-5, rtol=1e-5), "mismatch vs reference"

    print("KERNEL_OK")
</pallas_src>

<mosaic_0001>
module attributes {stable_mosaic.version = 11 : i64} {
  func.func @kernel(%arg0: i32, %arg1: memref<8x6xf32, #tpu.memory_space<vmem>>, %arg2: memref<3x128x128xf32, #tpu.memory_space<vmem>>, %arg3: memref<3x1x128xf32, #tpu.memory_space<vmem>>, %arg4: memref<8x128xf32, #tpu.memory_space<vmem>>) attributes {dimension_semantics = [#tpu.dimension_semantics<parallel>], iteration_bounds = array<i64: 1>, scalar_prefetch = 0 : i64, scratch_operands = 0 : i64, tpu.core_type = #tpu.core_type<tc>, window_params = [{transform_indices = @transform_0, window_bounds = array<i64: 8, 6>}, {pipeline_mode = #tpu.pipeline_mode<synchronous>, transform_indices = @transform_1, window_bounds = array<i64: 3, 128, 128>}, {pipeline_mode = #tpu.pipeline_mode<synchronous>, transform_indices = @transform_2, window_bounds = array<i64: 3, 1, 128>}, {transform_indices = @transform_3, window_bounds = array<i64: 8, 128>}]} {
    %c0 = arith.constant 0 : index
    %c0_0 = arith.constant 0 : index
    %0 = vector.load %arg1[%c0, %c0_0] : memref<8x6xf32, #tpu.memory_space<vmem>>, vector<8x6xf32>
    %c0_1 = arith.constant 0 : index
    %c0_2 = arith.constant 0 : index
    %c0_3 = arith.constant 0 : index
    %1 = vector.load %arg2[%c0_1, %c0_2, %c0_3] : memref<3x128x128xf32, #tpu.memory_space<vmem>>, vector<1x128x128xf32>
    %2 = vector.shape_cast %1 : vector<1x128x128xf32> to vector<128x128xf32>
    %3 = vector.extract_strided_slice %2 {offsets = [0, 0], sizes = [6, 128], strides = [1, 1]} : vector<128x128xf32> to vector<6x128xf32>
    %cst = arith.constant dense<0.000000e+00> : vector<8x128xf32>
    %4 = tpu.matmul %0, %3, %cst {dimension_numbers = #tpu.dot_dimension_numbers<[1], [0], [0], [1], [0, 0, 1, 1], [], []>} : vector<8x6xf32>, vector<6x128xf32>, vector<8x128xf32> -> vector<8x128xf32>
    %c0_4 = arith.constant 0 : index
    %c0_5 = arith.constant 0 : index
    %c0_6 = arith.constant 0 : index
    %5 = vector.load %arg3[%c0_4, %c0_5, %c0_6] : memref<3x1x128xf32, #tpu.memory_space<vmem>>, vector<1x1x128xf32>
    %6 = vector.shape_cast %5 : vector<1x1x128xf32> to vector<1x128xf32>
    %7 = vector.broadcast %6 : vector<1x128xf32> to vector<8x128xf32>
    %8 = arith.addf %4, %7 : vector<8x128xf32>
    %cst_7 = arith.constant 0.000000e+00 : f32
    %9 = vector.broadcast %cst_7 : f32 to vector<8x128xf32>
    %10 = arith.maximumf %8, %9 : vector<8x128xf32>
    %c1 = arith.constant 1 : index
    %c0_8 = arith.constant 0 : index
    %c0_9 = arith.constant 0 : index
    %11 = vector.load %arg2[%c1, %c0_8, %c0_9] : memref<3x128x128xf32, #tpu.memory_space<vmem>>, vector<1x128x128xf32>
    %12 = vector.shape_cast %11 : vector<1x128x128xf32> to vector<128x128xf32>
    %cst_10 = arith.constant dense<0.000000e+00> : vector<8x128xf32>
    %13 = tpu.matmul %10, %12, %cst_10 {dimension_numbers = #tpu.dot_dimension_numbers<[1], [0], [0], [1], [0, 0, 1, 1], [], []>} : vector<8x128xf32>, vector<128x128xf32>, vector<8x128xf32> -> vector<8x128xf32>
    %c1_11 = arith.constant 1 : index
    %c0_12 = arith.constant 0 : index
    %c0_13 = arith.constant 0 : index
    %14 = vector.load %arg3[%c1_11, %c0_12, %c0_13] : memref<3x1x128xf32, #tpu.memory_space<vmem>>, vector<1x1x128xf32>
    %15 = vector.shape_cast %14 : vector<1x1x128xf32> to vector<1x128xf32>
    %16 = vector.broadcast %15 : vector<1x128xf32> to vector<8x128xf32>
    %17 = arith.addf %13, %16 : vector<8x128xf32>
    %cst_14 = arith.constant 0.000000e+00 : f32
    %18 = vector.broadcast %cst_14 : f32 to vector<8x128xf32>
    %19 = arith.maximumf %17, %18 : vector<8x128xf32>
    %c2 = arith.constant 2 : index
    %c0_15 = arith.constant 0 : index
    %c0_16 = arith.constant 0 : index
    %20 = vector.load %arg2[%c2, %c0_15, %c0_16] : memref<3x128x128xf32, #tpu.memory_space<vmem>>, vector<1x128x128xf32>
    %21 = vector.shape_cast %20 : vector<1x128x128xf32> to vector<128x128xf32>
    %cst_17 = arith.constant dense<0.000000e+00> : vector<8x128xf32>
    %22 = tpu.matmul %19, %21, %cst_17 {dimension_numbers = #tpu.dot_dimension_numbers<[1], [0], [0], [1], [0, 0, 1, 1], [], []>} : vector<8x128xf32>, vector<128x128xf32>, vector<8x128xf32> -> vector<8x128xf32>
    %c2_18 = arith.constant 2 : index
    %c0_19 = arith.constant 0 : index
    %c0_20 = arith.constant 0 : index
    %23 = vector.load %arg3[%c2_18, %c0_19, %c0_20] : memref<3x1x128xf32, #tpu.memory_space<vmem>>, vector<1x1x128xf32>
    %24 = vector.shape_cast %23 : vector<1x1x128xf32> to vector<1x128xf32>
    %25 = vector.broadcast %24 : vector<1x128xf32> to vector<8x128xf32>
    %26 = arith.addf %22, %25 : vector<8x128xf32>
    %c0_21 = arith.constant 0 : index
    %c0_22 = arith.constant 0 : index
    %27 = vector.load %arg4[%c0_21, %c0_22] : memref<8x128xf32, #tpu.memory_space<vmem>>, vector<8x128xf32>
    tpu.vector_store %arg4[%c0_21, %c0_22], %26 {strides = array<i32>} : memref<8x128xf32, #tpu.memory_space<vmem>>, vector<8x128xf32>,
    return
  }
  func.func @transform_0(%arg0: i32) -> (i32, i32) {
    %c0_i32 = arith.constant 0 : i32
    %c0_i32_0 = arith.constant 0 : i32
    return %arg0, %c0_i32 : i32, i32
  }
  func.func @transform_1(%arg0: i32) -> (i32, i32, i32) {
    %c0_i32 = arith.constant 0 : i32
    %c0_i32_0 = arith.constant 0 : i32
    %c0_i32_1 = arith.constant 0 : i32
    %c0_i32_2 = arith.constant 0 : i32
    return %c0_i32, %c0_i32_0, %c0_i32_1 : i32, i32, i32
  }
  func.func @transform_2(%arg0: i32) -> (i32, i32, i32) {
    %c0_i32 = arith.constant 0 : i32
    %c0_i32_0 = arith.constant 0 : i32
    %c0_i32_1 = arith.constant 0 : i32
    %c0_i32_2 = arith.constant 0 : i32
    return %c0_i32, %c0_i32_0, %c0_i32_1 : i32, i32, i32
  }
  func.func @transform_3(%arg0: i32) -> (i32, i32) {
    %c0_i32 = arith.constant 0 : i32
    %c0_i32_0 = arith.constant 0 : i32
    return %arg0, %c0_i32 : i32, i32
  }
}

</mosaic_0001>

<llo_original>
// kernel: _lambda_.1
$region0: #{_lambda_.1}
  #allocation0 [shape = 'u32[]', space=smem, size = 0x4, offset = 0x4, fixed_abs, tag = 'smem constant byte address 0x4 - core index']
  #allocation1 [shape = 'u32[72,128]{1,0:T(1,128)}', space=vmem, size = 0x9000, scoped, tag = 'internal scratch']
  %s0 = inlined_call_operand.hbm [shape: f32[8,6], index: 0, kind: input, shape index: {}]
  %s1 = inlined_call_operand.hbm [shape: f32[3,128,128], index: 1, kind: input, shape index: {}]
  %s2 = inlined_call_operand.hbm [shape: f32[3,1,128], index: 2, kind: input, shape index: {}]
  %s3 = inlined_call_operand.vmem [shape: f32[8,128], index: 3, kind: output, shape index: {}]
  %s4 = sld [smem:[#allocation0]]
  $region34: #{_lambda_.1} parent=0
    _
  %s6 = ssub.s32 1, %s4
  %s7 = scalar_select 0, %s6, %s4
  $region1: #{_lambda_.1} parent=0
    #allocation2 [shape = 'u8[4096]{0}', space=vmem, size = 0x1000, scoped, tag = 'input window, operand 0, single buffered']
    #allocation3 [shape = 's32[1]{0}', space=sflag, size = 0x4, scoped, tag = 'scoped memory for _lambda_.1']
    #allocation4 [shape = 'u8[196608]{0}', space=vmem, size = 0x30000, scoped, tag = 'input window, operand 1, single buffered']
    #allocation5 [shape = 's32[1]{0}', space=sflag, size = 0x4, scoped, tag = 'scoped memory for _lambda_.1']
    #allocation6 [shape = 'u8[1536]{0}', space=vmem, size = 0x800, scoped, tag = 'input window, operand 2, single buffered']
    %8 = vsyncpa [#allocation3], 0
    %9 = vsyncpa [#allocation5], 0
    // Predicated region
    $region2: #{_lambda_.1} parent=1 // pred_check
      _
    $region3: #{_lambda_.1} parent=1 // pred_check_branch
      %11 = sbr.rel (0) target = $region5
    $region4: #{_lambda_.1} parent=1 // pred_region
      %13 = vsyncadd [#allocation3], 0
      %s15 = sshll.u32 %s0, 4
      %s16 = int_to_ptr.hbm [resolvable:$true] %s15
      %s17 = sshll.u32 [#allocation2], 4
      %s18 = int_to_ptr.vmem [resolvable:$true] %s17
      %20 = dma.hbm_to_vmem [thread:$0]  %s16, 128, %s18, [#allocation3]
    $region5: #{_lambda_.1} parent=1 // pred_fallthru
      _
    // Predicated region
    $region6: #{_lambda_.1} parent=1 // pred_check
      _
    $region7: #{_lambda_.1} parent=1 // pred_check_branch
      %22 = sbr.rel (0) target = $region9
    $region8: #{_lambda_.1} parent=1 // pred_region
      %24 = vsyncadd [#allocation5], 0
      %s25 = sshll.u32 %s1, 4
      %s26 = int_to_ptr.hbm [resolvable:$true] %s25
      %s27 = sshll.u32 [#allocation4], 4
      %s28 = int_to_ptr.vmem [resolvable:$true] %s27
      %33 = dma.hbm_to_vmem [thread:$0]  %s26, 6144, %s28, [#allocation5], 128, 128, 8
    $region9: #{_lambda_.1} parent=1 // pred_fallthru
      _
    // Predicated region
    $region10: #{_lambda_.1} parent=1 // pred_check
      _
    $region11: #{_lambda_.1} parent=1 // pred_check_branch
      %35 = sbr.rel (0) target = $region13
    $region12: #{_lambda_.1} parent=1 // pred_region
      %37 = vsyncadd [#allocation5], 0
      %s38 = sshll.u32 %s2, 4
      %s39 = int_to_ptr.hbm [resolvable:$true] %s38
      %s40 = sshll.u32 [#allocation6], 4
      %s41 = int_to_ptr.vmem [resolvable:$true] %s40
      %46 = dma.hbm_to_vmem [thread:$0]  %s39, 48, %s41, [#allocation5], 16, 16, 1
    $region13: #{_lambda_.1} parent=1 // pred_fallthru
      _
    // Predicated region
    $region14: #{_lambda_.1} parent=1 // pred_check
      _
    $region15: #{_lambda_.1} parent=1 // pred_check_branch
      %48 = sbr.rel (0) target = $region17
    $region16: #{_lambda_.1} parent=1 // pred_region
      %50 = dma.done [#allocation3], 128
    $region17: #{_lambda_.1} parent=1 // pred_fallthru
      _
    // Predicated region
    $region18: #{_lambda_.1} parent=1 // pred_check
      _
    $region19: #{_lambda_.1} parent=1 // pred_check_branch
      %52 = sbr.rel (0) target = $region21
    $region20: #{_lambda_.1} parent=1 // pred_region
      %54 = dma.done [#allocation5], 6144
    $region21: #{_lambda_.1} parent=1 // pred_fallthru
      _
    // Predicated region
    $region22: #{_lambda_.1} parent=1 // pred_check
      _
    $region23: #{_lambda_.1} parent=1 // pred_check_branch
      %56 = sbr.rel (0) target = $region25
    $region24: #{_lambda_.1} parent=1 // pred_region
      %58 = dma.done [#allocation5], 48
    $region25: #{_lambda_.1} parent=1 // pred_fallthru
      _
    %v59 = vld [vmem:[#allocation2] sm:$0xff]
    %v60 = vld [vmem:[#allocation4] sm:$0xff]
    %v61 = vld [vmem:[#allocation6] sm:$0x1]
    %v63 = vperm.slane %v61, 0
    %vm65 = vcmask 48128
    %v67 = vsel %vm65, %v59, 0
    %vm69 = vcmask 1045504
    %v71 = vsel %vm69, %v60, 0
    %73 = vmatpush.msra.mxu0 0.0
    %74 = vmatpush.msra.mxu0 0.0
    %75 = vmatpush.msra.mxu0 0.0
    %76 = vmatpush.msra.mxu0 0.0
    %77 = vmatpush.msra.mxu0 0.0
    %78 = vmatpush.msra.mxu0 0.0
    %79 = vmatpush.msra.mxu0 0.0
    %80 = vmatpush.msra.mxu0 0.0
    %81 = vmatpush.msra.mxu0 0.0
    %82 = vmatpush.msra.mxu0 0.0
    %83 = vmatpush.msra.mxu0 0.0
    %84 = vmatpush.msra.mxu0 0.0
    %85 = vmatpush.msra.mxu0 0.0
    %86 = vmatpush.msra.mxu0 0.0
    %87 = vmatpush.msra.mxu0 0.0
    %88 = vmatpush.msra.mxu0 %v71
    %89 = vmatmul.f32.gmra.mxu0 %v67
    %v90 = vpop.f32.mrf.mxu0
    %v91 = vadd.f32 %v63, %v90
    %92 = vdwg.mxu0
    %v93 = vmax.f32 %v91, 0.0
    %s94 = scalar_lea.vmem [#allocation4], 128
    %v95 = vld [vmem:[%s94] sm:$0xff]
    %v96 = vld [vmem:[%s94 + $0x8] sm:$0xff]
    %v97 = vld [vmem:[%s94 + $0x10] sm:$0xff]
    %v98 = vld [vmem:[%s94 + $0x18] sm:$0xff]
    %v99 = vld [vmem:[%s94 + $0x20] sm:$0xff]
    %v100 = vld [vmem:[%s94 + $0x28] sm:$0xff]
    %v101 = vld [vmem:[%s94 + $0x30] sm:$0xff]
    %v102 = vld [vmem:[%s94 + $0x38] sm:$0xff]
    %v103 = vld [vmem:[%s94 + $0x40] sm:$0xff]
    %v104 = vld [vmem:[%s94 + $0x48] sm:$0xff]
    %v105 = vld [vmem:[%s94 + $0x50] sm:$0xff]
    %v106 = vld [vmem:[%s94 + $0x58] sm:$0xff]
    %v107 = vld [vmem:[%s94 + $0x60] sm:$0xff]
    %v108 = vld [vmem:[%s94 + $0x68] sm:$0xff]
    %v109 = vld [vmem:[%s94 + $0x70] sm:$0xff]
    %v110 = vld [vmem:[%s94 + $0x78] sm:$0xff]
    %s111 = scalar_lea.vmem [#allocation6], 1
    %v112 = vld [vmem:[%s111] sm:$0x1]
    %v114 = vperm.slane %v112, 0
    %116 = vmatpush.msra.mxu0 %v110
    %117 = vmatpush.msra.mxu0 %v109
    %118 = vmatpush.msra.mxu0 %v108
    %119 = vmatpush.msra.mxu0 %v107
    %120 = vmatpush.msra.mxu0 %v106
    %121 = vmatpush.msra.mxu0 %v105
    %122 = vmatpush.msra.mxu0 %v104
    %123 = vmatpush.msra.mxu0 %v103
    %124 = vmatpush.msra.mxu0 %v102
    %125 = vmatpush.msra.mxu0 %v101
    %126 = vmatpush.msra.mxu0 %v100
    %127 = vmatpush.msra.mxu0 %v99
    %128 = vmatpush.msra.mxu0 %v98
    %129 = vmatpush.msra.mxu0 %v97
    %130 = vmatpush.msra.mxu0 %v96
    %131 = vmatpush.msra.mxu0 %v95
    %132 = vmatmul.f32.gmra.mxu0 %v93
    %v133 = vpop.f32.mrf.mxu0
    %v134 = vadd.f32 %v114, %v133
    %135 = vdwg.mxu0
    %v136 = vmax.f32 %v134, 0.0
    %s137 = scalar_lea.vmem [#allocation4], 256
    %v138 = vld [vmem:[%s137] sm:$0xff]
    %v139 = vld [vmem:[%s137 + $0x8] sm:$0xff]
    %v140 = vld [vmem:[%s137 + $0x10] sm:$0xff]
    %v141 = vld [vmem:[%s137 + $0x18] sm:$0xff]
    %v142 = vld [vmem:[%s137 + $0x20] sm:$0xff]
    %v143 = vld [vmem:[%s137 + $0x28] sm:$0xff]
    %v144 = vld [vmem:[%s137 + $0x30] sm:$0xff]
    %v145 = vld [vmem:[%s137 + $0x38] sm:$0xff]
    %v146 = vld [vmem:[%s137 + $0x40] sm:$0xff]
    %v147 = vld [vmem:[%s137 + $0x48] sm:$0xff]
    %v148 = vld [vmem:[%s137 + $0x50] sm:$0xff]
    %v149 = vld [vmem:[%s137 + $0x58] sm:$0xff]
    %v150 = vld [vmem:[%s137 + $0x60] sm:$0xff]
    %v151 = vld [vmem:[%s137 + $0x68] sm:$0xff]
    %v152 = vld [vmem:[%s137 + $0x70] sm:$0xff]
    %v153 = vld [vmem:[%s137 + $0x78] sm:$0xff]
    %s154 = scalar_lea.vmem [#allocation6], 2
    %v155 = vld [vmem:[%s154] sm:$0x1]
    %v157 = vperm.slane %v155, 0
    %159 = vmatpush.msra.mxu0 %v153
    %160 = vmatpush.msra.mxu0 %v152
    %161 = vmatpush.msra.mxu0 %v151
    %162 = vmatpush.msra.mxu0 %v150
    %163 = vmatpush.msra.mxu0 %v149
    %164 = vmatpush.msra.mxu0 %v148
    %165 = vmatpush.msra.mxu0 %v147
    %166 = vmatpush.msra.mxu0 %v146
    %167 = vmatpush.msra.mxu0 %v145
    %168 = vmatpush.msra.mxu0 %v144
    %169 = vmatpush.msra.mxu0 %v143
    %170 = vmatpush.msra.mxu0 %v142
    %171 = vmatpush.msra.mxu0 %v141
    %172 = vmatpush.msra.mxu0 %v140
    %173 = vmatpush.msra.mxu0 %v139
    %174 = vmatpush.msra.mxu0 %v138
    %175 = vmatmul.f32.gmra.mxu0 %v136
    %v176 = vpop.f32.mrf.mxu0
    %v177 = vadd.f32 %v157, %v176
    %178 = vdwg.mxu0
    %179 = vst [vmem:[%s3] sm:$0xff] %v177
    // Predicated region
    $region26: #{_lambda_.1} parent=1 // pred_check
      _
    $region27: #{_lambda_.1} parent=1 // pred_check_branch
      %181 = sbr.rel (0) target = $region29
    $region28: #{_lambda_.1} parent=1 // pred_region
      _
    $region29: #{_lambda_.1} parent=1 // pred_fallthru
      _
    // Predicated region
    $region30: #{_lambda_.1} parent=1 // pred_check
      _
    $region31: #{_lambda_.1} parent=1 // pred_check_branch
      %183 = sbr.rel (0) target = $region33
    $region32: #{_lambda_.1} parent=1 // pred_region
      _
    $region33: #{_lambda_.1} parent=1 // pred_fallthru
      _
    %184 = vsyncpa [#allocation3], 1
    %185 = vsyncpa [#allocation5], 1

</llo_original>
